<compile_context>
chip_gen: v5e
topology: v5e:2x2
jax: 0.10.0
libtpu: 0.0.40
codegen_flags: <defaults>
</compile_context>

<pallas_src>
import functools

import jax
import jax.numpy as jnp
from jax.experimental import pallas as pl
from jax.experimental.pallas import tpu as pltpu

LANE = 128
SUBLANE = 8


def _cdiv(a, b):
    return -(-a // b)


def _round_up(a, b):
    return _cdiv(a, b) * b


def _soft_dice_kernel(x_ref, t_ref, loss_ref, acc_ref, *,
                      num_classes, smooth, denom_const, hw):
    # x_ref:    (C, S_TILE, 128)  logits tile in caller dtype (batch squeezed)
    # t_ref:    (S_TILE, 128)     int32 label tile (batch squeezed)
    # loss_ref: (1, 8, 128)       f32 per-batch output (loss broadcast in tile)
    # acc_ref:  (8, 128)          f32 running per-lane intersection accumulator
    s = pl.program_id(1)
    blk_s, lanes = t_ref.shape

    @pl.when(s == 0)
    def _init():
        acc_ref[...] = jnp.zeros_like(acc_ref)

    t = t_ref[...]

    # Validity mask: covers the 128-lane tail pad and the partial last spatial
    # block (whose padded rows hold unspecified VMEM contents).
    row = jax.lax.broadcasted_iota(jnp.int32, (blk_s, lanes), 0) + s * blk_s
    col = jax.lax.broadcasted_iota(jnp.int32, (blk_s, lanes), 1)
    valid = (row * lanes + col) < hw

    if num_classes == 2:
        # Binary special case: softmax(x)[t] == sigmoid((2t-1) * (x1 - x0)).
        x0 = x_ref[0].astype(jnp.float32)
        x1 = x_ref[1].astype(jnp.float32)
        sign = (2 * t - 1).astype(jnp.float32)
        z = sign * (x1 - x0)
        p_t = 1.0 / (1.0 + jnp.exp(-z))          # one EUP exp per pixel
    else:
        # General C: unrolled channel loop, only (S, 128) temporaries live.
        m = x_ref[0].astype(jnp.float32)
        for c in range(1, num_classes):
            m = jnp.maximum(m, x_ref[c].astype(jnp.float32))
        denom = jnp.zeros((blk_s, lanes), jnp.float32)
        e_t = jnp.zeros((blk_s, lanes), jnp.float32)
        for c in range(num_classes):
            e_c = jnp.exp(x_ref[c].astype(jnp.float32) - m)
            denom = denom + e_c
            e_t = e_t + jnp.where(t == c, e_c, 0.0)
        p_t = e_t / denom

    contrib = jnp.where(valid, p_t, 0.0)
    # Collapse sublane groups with vreg-wise VALU adds into the (8,128) scratch;
    # the single cross-lane reduce is deferred to finalize.
    acc_ref[...] += jnp.sum(contrib.reshape(blk_s // SUBLANE, SUBLANE, lanes),
                            axis=0)

    @pl.when(s == pl.num_programs(1) - 1)
    def _finalize():
        inter = jnp.sum(acc_ref[...], keepdims=True)          # (1, 1)
        dsc = (2.0 * inter + smooth) / (denom_const + smooth)
        loss_ref[...] = jnp.broadcast_to(1.0 - dsc, loss_ref.shape)


def _physical_vmem_bytes():
    try:
        return int(pltpu.get_tpu_info().vmem_capacity_bytes)
    except Exception:
        return 64 << 20            # conservative (v7x per-TensorCore)


def _choose_s_tile(C, s_arr, x_bytes, budget_bytes):
    """Pick the spatial tile (sublanes, multiple of 8) fitting the VMEM budget."""
    # Per sublane: double-buffered logits block + double-buffered int32 label
    # block + ~6 live f32 (S,128) temporaries inside the kernel.
    per_sublane = 2 * (C * LANE * x_bytes) + 2 * (LANE * 4) + 6 * (LANE * 4)
    s_tile = max(SUBLANE, (budget_bytes // per_sublane // SUBLANE) * SUBLANE)
    s_max_fit = max(SUBLANE, (s_arr // SUBLANE) * SUBLANE)   # block <= array dim
    s_tile = min(s_tile, s_max_fit)
    n_s = _cdiv(s_arr, s_tile)
    # Rebalance: even blocks with minimal tail slack, still a multiple of 8.
    s_tile = min(_round_up(_cdiv(s_arr, n_s), SUBLANE), s_max_fit)
    n_s = _cdiv(s_arr, s_tile)
    return s_tile, n_s


def soft_dice_loss(logits_nchw, target_nhw, num_classes, smooth=1.0,
                   vmem_budget_bytes=None):
    """Pallas implementation of SoftDiceLoss.forward (sum over batch of 1 - dsc)."""
    B, C, H, W = logits_nchw.shape
    assert C == num_classes
    HW = H * W

    x = logits_nchw.reshape(B, C, HW)                 # no dtype cast (bf16 stays bf16)
    t = target_nhw.reshape(B, HW)
    if t.dtype != jnp.int32:
        t = t.astype(jnp.int32)

    # Spatial extent in 128-lane rows; pad only when HW is not a multiple of
    # 128 (lane tail) or smaller than one 8x128 vreg.  Padded pixels are
    # masked in-kernel, so pad values are irrelevant.
    s_arr = max(_cdiv(HW, LANE), SUBLANE)
    hw_pad = s_arr * LANE
    if hw_pad != HW:
        x = jnp.pad(x, ((0, 0), (0, 0), (0, hw_pad - HW)))
        t = jnp.pad(t, ((0, 0), (0, hw_pad - HW)))
    x = x.reshape(B, C, s_arr, LANE)
    t = t.reshape(B, s_arr, LANE)

    cap = _physical_vmem_bytes()
    if vmem_budget_bytes is None:
        vmem_budget_bytes = min(cap // 3, 24 << 20)
    x_bytes = jnp.dtype(x.dtype).itemsize
    s_tile, n_s = _choose_s_tile(C, s_arr, x_bytes, vmem_budget_bytes)
    vmem_limit = int(max(32 << 20,
                         min(cap - (4 << 20), 2 * vmem_budget_bytes + (8 << 20))))

    kernel = functools.partial(
        _soft_dice_kernel, num_classes=C, smooth=float(smooth),
        denom_const=2.0 * HW, hw=HW)

    out = pl.pallas_call(
        kernel,
        out_shape=jax.ShapeDtypeStruct((B, SUBLANE, LANE), jnp.float32),
        grid_spec=pltpu.PrefetchScalarGridSpec(
            num_scalar_prefetch=0,
            grid=(B, n_s),
            in_specs=[
                pl.BlockSpec((None, C, s_tile, LANE), lambda b, s: (b, 0, s, 0)),
                pl.BlockSpec((None, s_tile, LANE), lambda b, s: (b, s, 0)),
            ],
            out_specs=pl.BlockSpec((1, SUBLANE, LANE), lambda b, s: (b, 0, 0)),
            scratch_shapes=[pltpu.VMEM((SUBLANE, LANE), jnp.float32)],
        ),
        compiler_params=pltpu.CompilerParams(
            dimension_semantics=("parallel", "arbitrary"),
            vmem_limit_bytes=vmem_limit,
        ),
    )(x, t)
    # per-batch losses are broadcast into each (8,128) output tile; read [0,0]
    return jnp.sum(out[:, 0, 0])


def _ref_soft_dice(logits, target, num_classes, smooth=1.0):
    """Pure-JAX reference mirroring the PyTorch forward."""
    B = logits.shape[0]
    p = jax.nn.softmax(logits.astype(jnp.float32), axis=1).reshape(B, -1)
    oh = jax.nn.one_hot(target, num_classes, dtype=jnp.float32)   # (B, H, W, C)
    oh = jnp.transpose(oh, (0, 3, 1, 2)).reshape(B, -1)
    inter = jnp.sum(p * oh, axis=1)
    dsc = (2.0 * inter + smooth) / (jnp.sum(oh, axis=1) + jnp.sum(p, axis=1) + smooth)
    return jnp.sum(1.0 - dsc)


if __name__ == "__main__":
    key = jax.random.PRNGKey(0)
    k1, k2, k3, k4 = jax.random.split(key, 4)

    # --- binary path (C == 2), the module's intended use -------------------
    B, C, H, W = 2, 2, 16, 16
    logits = jax.random.normal(k1, (B, C, H, W), dtype=jnp.float32)
    target = jax.random.randint(k2, (B, H, W), 0, 2, dtype=jnp.int32)

    loss = jax.block_until_ready(soft_dice_loss(logits, target, num_classes=C, smooth=1))
    ref = _ref_soft_dice(logits, target, num_classes=C, smooth=1.0)
    assert jnp.allclose(loss, ref, atol=1e-4, rtol=1e-4), (loss, ref)

    # bf16 logits stay bf16 in HBM (halved DMA traffic); kernel upcasts to f32.
    loss_bf16 = jax.block_until_ready(
        soft_dice_loss(logits.astype(jnp.bfloat16), target, num_classes=C, smooth=1))
    ref_bf16 = _ref_soft_dice(logits.astype(jnp.bfloat16), target, num_classes=C, smooth=1.0)
    assert jnp.allclose(loss_bf16, ref_bf16, atol=1e-4, rtol=1e-4), (loss_bf16, ref_bf16)

    # --- general-C path + ragged spatial extent (exercises in-kernel mask) --
    B2, C2, H2, W2 = 2, 4, 13, 21     # H*W = 273, not a multiple of 128
    logits2 = jax.random.normal(k3, (B2, C2, H2, W2), dtype=jnp.float32)
    target2 = jax.random.randint(k4, (B2, H2, W2), 0, 2, dtype=jnp.int32)
    loss2 = jax.block_until_ready(soft_dice_loss(logits2, target2, num_classes=C2, smooth=1))
    ref2 = _ref_soft_dice(logits2, target2, num_classes=C2, smooth=1.0)
    assert jnp.allclose(loss2, ref2, atol=1e-4, rtol=1e-4), (loss2, ref2)

    print("KERNEL_OK")
</pallas_src>

<mosaic_0001>
module attributes {stable_mosaic.version = 11 : i64} {
  func.func @_soft_dice_kernel(%arg0: i32, %arg1: i32, %arg2: memref<1x2x8x128xf32, #tpu.memory_space<vmem>>, %arg3: memref<1x8x128xi32, #tpu.memory_space<vmem>>, %arg4: memref<1x8x128xf32, #tpu.memory_space<vmem>>, %arg5: memref<8x128xf32, #tpu.memory_space<vmem>>) attributes {dimension_semantics = [#tpu.dimension_semantics<parallel>, #tpu.dimension_semantics<arbitrary>], iteration_bounds = array<i64: 2, 1>, scalar_prefetch = 0 : i64, scratch_operands = 1 : i64, tpu.core_type = #tpu.core_type<tc>, window_params = [{transform_indices = @transform_0, window_bounds = array<i64: 1, 2, 8, 128>}, {transform_indices = @transform_1, window_bounds = array<i64: 1, 8, 128>}, {transform_indices = @transform_2, window_bounds = array<i64: 1, 8, 128>}]} {
    %c0_i32 = arith.constant 0 : i32
    %0 = arith.cmpi eq, %arg1, %c0_i32 : i32
    %1 = arith.extui %0 : i1 to i32
    %c0_i32_0 = arith.constant 0 : i32
    %2 = arith.cmpi ne, %1, %c0_i32_0 : i32
    scf.if %2 {
      %cst_20 = arith.constant 0.000000e+00 : f32
      %43 = vector.broadcast %cst_20 : f32 to vector<8x128xf32>
      %c0_21 = arith.constant 0 : index
      %c0_22 = arith.constant 0 : index
      %44 = vector.load %arg5[%c0_21, %c0_22] : memref<8x128xf32, #tpu.memory_space<vmem>>, vector<8x128xf32>
      tpu.vector_store %arg5[%c0_21, %c0_22], %43 {strides = array<i32>} : memref<8x128xf32, #tpu.memory_space<vmem>>, vector<8x128xf32>,
    } else {
    }
    %c0 = arith.constant 0 : index
    %c0_1 = arith.constant 0 : index
    %c0_2 = arith.constant 0 : index
    %3 = vector.load %arg3[%c0, %c0_1, %c0_2] : memref<1x8x128xi32, #tpu.memory_space<vmem>>, vector<1x8x128xi32>
    %4 = vector.shape_cast %3 : vector<1x8x128xi32> to vector<8x128xi32>
    %5 = tpu.iota {dimensions = array<i32: 0>} : vector<8x128xi32>
    %c8_i32 = arith.constant 8 : i32
    %6 = arith.muli %arg1, %c8_i32 : i32
    %7 = vector.broadcast %6 : i32 to vector<8x128xi32>
    %8 = arith.addi %5, %7 : vector<8x128xi32>
    %9 = tpu.iota {dimensions = array<i32: 1>} : vector<8x128xi32>
    %c128_i32 = arith.constant 128 : i32
    %10 = vector.broadcast %c128_i32 : i32 to vector<8x128xi32>
    %11 = arith.muli %8, %10 : vector<8x128xi32>
    %12 = arith.addi %11, %9 : vector<8x128xi32>
    %c256_i32 = arith.constant 256 : i32
    %13 = vector.broadcast %c256_i32 : i32 to vector<8x128xi32>
    %14 = arith.cmpi slt, %12, %13 : vector<8x128xi32>
    %c0_3 = arith.constant 0 : index
    %c0_4 = arith.constant 0 : index
    %c0_5 = arith.constant 0 : index
    %c0_6 = arith.constant 0 : index
    %15 = vector.load %arg2[%c0_3, %c0_4, %c0_5, %c0_6] : memref<1x2x8x128xf32, #tpu.memory_space<vmem>>, vector<1x1x8x128xf32>
    %16 = vector.shape_cast %15 : vector<1x1x8x128xf32> to vector<8x128xf32>
    %c0_7 = arith.constant 0 : index
    %c1 = arith.constant 1 : index
    %c0_8 = arith.constant 0 : index
    %c0_9 = arith.constant 0 : index
    %17 = vector.load %arg2[%c0_7, %c1, %c0_8, %c0_9] : memref<1x2x8x128xf32, #tpu.memory_space<vmem>>, vector<1x1x8x128xf32>
    %18 = vector.shape_cast %17 : vector<1x1x8x128xf32> to vector<8x128xf32>
    %c2_i32 = arith.constant 2 : i32
    %19 = vector.broadcast %c2_i32 : i32 to vector<8x128xi32>
    %20 = arith.muli %19, %4 : vector<8x128xi32>
    %c1_i32 = arith.constant 1 : i32
    %21 = vector.broadcast %c1_i32 : i32 to vector<8x128xi32>
    %22 = arith.subi %20, %21 : vector<8x128xi32>
    %23 = arith.sitofp %22 : vector<8x128xi32> to vector<8x128xf32>
    %24 = arith.subf %18, %16 : vector<8x128xf32>
    %25 = arith.mulf %23, %24 : vector<8x128xf32>
    %cst = arith.constant 0.000000e+00 : f32
    %26 = vector.broadcast %cst : f32 to vector<8x128xf32>
    %27 = arith.subf %26, %25 : vector<8x128xf32>
    %28 = math.exp %27 : vector<8x128xf32>
    %cst_10 = arith.constant 1.000000e+00 : f32
    %29 = vector.broadcast %cst_10 : f32 to vector<8x128xf32>
    %30 = arith.addf %29, %28 : vector<8x128xf32>
    %cst_11 = arith.constant 1.000000e+00 : f32
    %31 = vector.broadcast %cst_11 : f32 to vector<8x128xf32>
    %32 = arith.divf %31, %30 : vector<8x128xf32>
    %cst_12 = arith.constant 0.000000e+00 : f32
    %33 = vector.broadcast %cst_12 : f32 to vector<8x128xf32>
    %34 = arith.select %14, %32, %33 : vector<8x128xi1>, vector<8x128xf32>
    %c0_13 = arith.constant 0 : index
    %c0_14 = arith.constant 0 : index
    %35 = vector.load %arg5[%c0_13, %c0_14] : memref<8x128xf32, #tpu.memory_space<vmem>>, vector<8x128xf32>
    %36 = vector.shape_cast %34 : vector<8x128xf32> to vector<1x8x128xf32>
    %cst_15 = arith.constant dense<0.000000e+00> : vector<8x128xf32>
    %37 = vector.multi_reduction <add>, %36, %cst_15 [0] : vector<1x8x128xf32> to vector<8x128xf32>
    %38 = arith.addf %35, %37 : vector<8x128xf32>
    %c0_16 = arith.constant 0 : index
    %c0_17 = arith.constant 0 : index
    %39 = vector.load %arg5[%c0_16, %c0_17] : memref<8x128xf32, #tpu.memory_space<vmem>>, vector<8x128xf32>
    tpu.vector_store %arg5[%c0_16, %c0_17], %38 {strides = array<i32>} : memref<8x128xf32, #tpu.memory_space<vmem>>, vector<8x128xf32>,
    %c0_i32_18 = arith.constant 0 : i32
    %40 = arith.cmpi eq, %arg1, %c0_i32_18 : i32
    %41 = arith.extui %40 : i1 to i32
    %c0_i32_19 = arith.constant 0 : i32
    %42 = arith.cmpi ne, %41, %c0_i32_19 : i32
    scf.if %42 {
      %c0_20 = arith.constant 0 : index
      %c0_21 = arith.constant 0 : index
      %43 = vector.load %arg5[%c0_20, %c0_21] : memref<8x128xf32, #tpu.memory_space<vmem>>, vector<8x128xf32>
      %44 = vector.shape_cast %43 : vector<8x128xf32> to vector<1x8x128xf32>
      %cst_22 = arith.constant dense<0.000000e+00> : vector<1xf32>
      %45 = vector.multi_reduction <add>, %44, %cst_22 [1, 2] : vector<1x8x128xf32> to vector<1xf32>
      %46 = vector.shape_cast %45 : vector<1xf32> to vector<1x1x1xf32>
      %47 = vector.extract %46[0, 0, 0] : f32 from vector<1x1x1xf32>
      %48 = vector.broadcast %47 : f32 to vector<1x1xf32>
      %cst_23 = arith.constant 2.000000e+00 : f32
      %49 = vector.broadcast %cst_23 : f32 to vector<1x1xf32>
      %50 = arith.mulf %49, %48 : vector<1x1xf32>
      %cst_24 = arith.constant 1.000000e+00 : f32
      %51 = vector.broadcast %cst_24 : f32 to vector<1x1xf32>
      %52 = arith.addf %50, %51 : vector<1x1xf32>
      %cst_25 = arith.constant 5.130000e+02 : f32
      %53 = vector.broadcast %cst_25 : f32 to vector<1x1xf32>
      %54 = arith.divf %52, %53 : vector<1x1xf32>
      %cst_26 = arith.constant 1.000000e+00 : f32
      %55 = vector.broadcast %cst_26 : f32 to vector<1x1xf32>
      %56 = arith.subf %55, %54 : vector<1x1xf32>
      %57 = vector.shape_cast %56 : vector<1x1xf32> to vector<1x1x1xf32>
      %58 = vector.broadcast %57 : vector<1x1x1xf32> to vector<1x8x128xf32>
      %c0_27 = arith.constant 0 : index
      %c0_28 = arith.constant 0 : index
      %c0_29 = arith.constant 0 : index
      %59 = vector.load %arg4[%c0_27, %c0_28, %c0_29] : memref<1x8x128xf32, #tpu.memory_space<vmem>>, vector<1x8x128xf32>
      tpu.vector_store %arg4[%c0_27, %c0_28, %c0_29], %58 {strides = array<i32>} : memref<1x8x128xf32, #tpu.memory_space<vmem>>, vector<1x8x128xf32>,
    } else {
    }
    return
  }
  func.func @transform_0(%arg0: i32, %arg1: i32) -> (i32, i32, i32, i32) {
    %c0_i32 = arith.constant 0 : i32
    %c0_i32_0 = arith.constant 0 : i32
    %c0_i32_1 = arith.constant 0 : i32
    return %arg0, %c0_i32, %arg1, %c0_i32_0 : i32, i32, i32, i32
  }
  func.func @transform_1(%arg0: i32, %arg1: i32) -> (i32, i32, i32) {
    %c0_i32 = arith.constant 0 : i32
    %c0_i32_0 = arith.constant 0 : i32
    return %arg0, %arg1, %c0_i32 : i32, i32, i32
  }
  func.func @transform_2(%arg0: i32, %arg1: i32) -> (i32, i32, i32) {
    %c0_i32 = arith.constant 0 : i32
    %c0_i32_0 = arith.constant 0 : i32
    %c0_i32_1 = arith.constant 0 : i32
    return %arg0, %c0_i32, %c0_i32_0 : i32, i32, i32
  }
}

</mosaic_0001>

<llo_original>
// kernel: tpu_custom_call.1
$region0: #{tpu_custom_call.1}
  #allocation0 [shape = 'u32[]', space=smem, size = 0x4, offset = 0x4, fixed_abs, tag = 'smem constant byte address 0x4 - core index']
  #allocation1 [shape = 'u32[72,128]{1,0:T(1,128)}', space=vmem, size = 0x9000, scoped, tag = 'internal scratch']
  #allocation2 [shape = 'f32[8,128]{1,0:T(8,128)}', space=vmem, size = 0x1000, scoped, tag = 'scratch operand']
  %s0 = inlined_call_operand.hbm [shape: f32[2,2,8,128], index: 0, kind: input, shape index: {}]
  %s1 = inlined_call_operand.hbm [shape: s32[2,8,128], index: 1, kind: input, shape index: {}]
  %s2 = inlined_call_operand.hbm [shape: f32[2,8,128], index: 2, kind: output, shape index: {}]
  %s3 = sld [smem:[#allocation0]]
  $region57: #{tpu_custom_call.1} parent=0
    _
  %s5 = ssub.s32 1, %s3
  %s6 = scalar_select 0, %s5, %s3
  $region1: #{tpu_custom_call.1} parent=0
    #allocation3 [shape = 'u8[16384]{0}', space=vmem, size = 0x4000, scoped, tag = 'input window, operand 0']
    #allocation4 [shape = 's32[2]{0}', space=sflag, size = 0x8, scoped, tag = 'scoped memory for tpu_custom_call.1']
    #allocation5 [shape = 's32[2]{0}', space=sflag, size = 0x8, scoped, tag = 'scoped memory for tpu_custom_call.1']
    #allocation6 [shape = 'u8[8192]{0}', space=vmem, size = 0x2000, scoped, tag = 'input window, operand 1']
    #allocation7 [shape = 's32[2]{0}', space=sflag, size = 0x8, scoped, tag = 'scoped memory for tpu_custom_call.1']
    #allocation8 [shape = 'u8[8192]{0}', space=vmem, size = 0x2000, scoped, tag = 'output window, operand 0']
    %7 = vsyncpa [#allocation4], 0
    %s8 = scalar_lea.sflag [#allocation4], 1
    %9 = vsyncpa %s8, 0
    %10 = vsyncpa [#allocation7], 0
    %s11 = scalar_lea.sflag [#allocation7], 1
    %12 = vsyncpa %s11, 0
    %13 = vsyncpa [#allocation5], 0
    %s14 = scalar_lea.sflag [#allocation5], 1
    %15 = vsyncpa %s14, 0
    loop: start=0, step=1, limit=4
    $region2: #{tpu_custom_call.1} parent=1 // loop_pre_header
      _
    $region3: #{tpu_custom_call.1} parent=1 // loop_header
      %s17 = sphi 0, %s21
      %p18 = scmp.ge.s32.totalorder %s17, 4
      %s24 = sphi 0, %s36
      %s25 = sphi 0, %s32
      %s26 = sphi 0, %s24
      %s27 = sphi 0, %s25
      %s28 = sphi 0, %s26
      %s29 = sphi 0, %s27
      %s41 = sphi 0, %s43
      %s44 = sphi 0, %s41
      %s45 = sphi 0, %s44
      %s61 = sphi 0, %s45
      %s69 = sphi 0, %s71
      %s72 = sphi 0, %s69
      %s73 = sphi 0, %s72
      %s89 = sphi 0, %s73
      %s95 = sphi 0, %s97
      %s98 = sphi 0, %s95
      %s99 = sphi 0, %s98
      %s115 = sphi 0, %s99
    $region4: #{tpu_custom_call.1} parent=1 // loop_header_branch
      %20 = sbr.rel (%p18) target = $region8
    $region5: #{tpu_custom_call.1} parent=1 // loop_body
      %s22 = ssub.s32 %s17, 1
      %s23 = ssub.s32 %s17, 2
      %s30 = sadd.s32 1, %s25
      %p31 = scmp.ge.s32.totalorder %s30, 1
      %s32 = scalar_select %p31, 0, %s30
      %s33 = sadd.s32 1, %s24
      %s34 = scalar_select %p31, %s33, %s24
      %p35 = scmp.ge.s32.totalorder %s34, 2
      %s36 = scalar_select %p35, 0, %s34
      %s37 = ssub.s32 %s24, %s36
      %s38 = ssub.s32 %s25, %s32
      %s39 = sor.u32 %s37, %s38
      %p40 = scmp.eq.s32.totalorder %s39, 0
      %s42 = sadd.s32 %s41, 1
      %s43 = scalar_select %p40, %s41, %s42
      %p46 = pneg %p40
      %p47 = scmp.eq.s32.totalorder %s17, 1
      %p48 = por %p46, %p47
      %p49 = scmp.ne.s32.totalorder %s41, %s44
      %p50 = scmp.eq.s32.totalorder %s17, 0
      %p51 = por %p49, %p50
      %p52 = scmp.ne.s32.totalorder %s41, %s44
      %p53 = scmp.eq.s32.totalorder %s22, 1
      %p54 = por %p52, %p53
      %p55 = scmp.ne.s32.totalorder %s44, %s45
      %p56 = scmp.eq.s32.totalorder %s22, 0
      %p57 = por %p55, %p56
      %p58 = scmp.ne.s32.totalorder %s44, %s45
      %p59 = scmp.eq.s32.totalorder %s23, 1
      %p60 = por %p58, %p59
      %p62 = scmp.ne.s32.totalorder %s45, %s61
      %p63 = scmp.eq.s32.totalorder %s23, 0
      %p64 = por %p62, %p63
      %s65 = ssub.s32 %s24, %s36
      %s66 = ssub.s32 %s25, %s32
      %s67 = sor.u32 %s65, %s66
      %p68 = scmp.eq.s32.totalorder %s67, 0
      %s70 = sadd.s32 %s69, 1
      %s71 = scalar_select %p68, %s69, %s70
      %p74 = pneg %p68
      %p75 = scmp.eq.s32.totalorder %s17, 1
      %p76 = por %p74, %p75
      %p77 = scmp.ne.s32.totalorder %s69, %s72
      %p78 = scmp.eq.s32.totalorder %s17, 0
      %p79 = por %p77, %p78
      %p80 = scmp.ne.s32.totalorder %s69, %s72
      %p81 = scmp.eq.s32.totalorder %s22, 1
      %p82 = por %p80, %p81
      %p83 = scmp.ne.s32.totalorder %s72, %s73
      %p84 = scmp.eq.s32.totalorder %s22, 0
      %p85 = por %p83, %p84
      %p86 = scmp.ne.s32.totalorder %s72, %s73
      %p87 = scmp.eq.s32.totalorder %s23, 1
      %p88 = por %p86, %p87
      %p90 = scmp.ne.s32.totalorder %s73, %s89
      %p91 = scmp.eq.s32.totalorder %s23, 0
      %p92 = por %p90, %p91
      %s93 = ssub.s32 %s24, %s36
      %p94 = scmp.eq.s32.totalorder %s93, 0
      %s96 = sadd.s32 %s95, 1
      %s97 = scalar_select %p94, %s95, %s96
      %p100 = pneg %p94
      %p101 = scmp.eq.s32.totalorder %s17, 1
      %p102 = por %p100, %p101
      %p103 = scmp.ne.s32.totalorder %s95, %s98
      %p104 = scmp.eq.s32.totalorder %s17, 0
      %p105 = por %p103, %p104
      %p106 = scmp.ne.s32.totalorder %s95, %s98
      %p107 = scmp.eq.s32.totalorder %s22, 1
      %p108 = por %p106, %p107
      %p109 = scmp.ne.s32.totalorder %s98, %s99
      %p110 = scmp.eq.s32.totalorder %s22, 0
      %p111 = por %p109, %p110
      %p112 = scmp.ne.s32.totalorder %s98, %s99
      %p113 = scmp.eq.s32.totalorder %s23, 1
      %p114 = por %p112, %p113
      %p116 = scmp.ne.s32.totalorder %s99, %s115
      %p117 = scmp.eq.s32.totalorder %s23, 0
      %p118 = por %p116, %p117
      %p119 = scmp.le.s32.totalorder 1, %s17
      %p120 = scmp.lt.s32.totalorder %s17, 3
      %p121 = pnand %p119, %p120
      %p122 = pneg %p121
      // Predicated region
      $region9: #{tpu_custom_call.1} parent=5 // pred_check
        _
      $region10: #{tpu_custom_call.1} parent=5 // pred_check_branch
        %124 = sbr.rel (%p121) target = $region12
      $region11: #{tpu_custom_call.1} parent=5 // pred_region
        %s125 = ssub.s32 %s17, 1
      $region12: #{tpu_custom_call.1} parent=5 // pred_fallthru
        _
      %p126 = scmp.lt.s32.totalorder %s17, 2
      // Predicated region
      $region13: #{tpu_custom_call.1} parent=5 // pred_check
        %p127 = pneg %p126
      $region14: #{tpu_custom_call.1} parent=5 // pred_check_branch
        %129 = sbr.rel (%p127) target = $region16
      $region15: #{tpu_custom_call.1} parent=5 // pred_region
        // Predicated region
        $region17: #{tpu_custom_call.1} parent=15 // pred_check
          %p130 = pneg %p51
        $region18: #{tpu_custom_call.1} parent=15 // pred_check_branch
          %132 = sbr.rel (%p130) target = $region20
        $region19: #{tpu_custom_call.1} parent=15 // pred_region
          %s133 = sand.u32 %s41, 1
          %s134 = scalar_lea.sflag [#allocation4], %s133
          %s135 = sand.u32 %s41, 1
          %s136 = smul.addr %s135, 16
          %s137 = scalar_lea.vmem [#allocation3], %s136
          %139 = vsyncadd %s134, 0
          %s140 = smul.addr %s24, 2
          %s141 = sadd.s32 %s25, %s140
          %s142 = smul.addr %s141, 8
          %s143 = scalar_lea.hbm %s0, %s142
          %s144 = sshll.u32 %s143, 4
          %s145 = int_to_ptr.hbm [resolvable:$true] %s144
          %s146 = sshll.u32 %s137, 4
          %s147 = int_to_ptr.vmem [resolvable:$true] %s146
          %152 = dma.hbm_to_vmem [thread:$0]  %s145, 256, %s147, %s134, 128, 128, 8
        $region20: #{tpu_custom_call.1} parent=15 // pred_fallthru
          _
        // Predicated region
        $region21: #{tpu_custom_call.1} parent=15 // pred_check
          %p153 = pneg %p79
        $region22: #{tpu_custom_call.1} parent=15 // pred_check_branch
          %155 = sbr.rel (%p153) target = $region24
        $region23: #{tpu_custom_call.1} parent=15 // pred_region
          %s156 = sand.u32 %s69, 1
          %s157 = scalar_lea.sflag [#allocation7], %s156
          %s158 = sand.u32 %s69, 1
          %s159 = smul.addr %s158, 8
          %s160 = scalar_lea.vmem [#allocation6], %s159
          %162 = vsyncadd %s157, 0
          %s163 = sadd.s32 %s25, %s24
          %s164 = smul.addr %s163, 8
          %s165 = scalar_lea.hbm %s1, %s164
          %s167 = sshll.u32 %s165, 4
          %s168 = int_to_ptr.hbm [resolvable:$true] %s167
          %s169 = sshll.u32 %s160, 4
          %s170 = int_to_ptr.vmem [resolvable:$true] %s169
          %172 = dma.hbm_to_vmem [thread:$0]  %s168, 128, %s170, %s157
        $region24: #{tpu_custom_call.1} parent=15 // pred_fallthru
          _
      $region16: #{tpu_custom_call.1} parent=5 // pred_fallthru
        _
      %p173 = scmp.le.s32.totalorder 1, %s17
      %p174 = scmp.lt.s32.totalorder %s17, 3
      %p175 = pnand %p173, %p174
      %p176 = pneg %p175
      // Predicated region
      $region25: #{tpu_custom_call.1} parent=5 // pred_check
        _
      $region26: #{tpu_custom_call.1} parent=5 // pred_check_branch
        %178 = sbr.rel (%p175) target = $region28
      $region27: #{tpu_custom_call.1} parent=5 // pred_region
        %s179 = ssub.s32 %s17, 1
        %s180 = sand.u32 %s44, 1
        %s181 = scalar_lea.sflag [#allocation4], %s180
        %s182 = sand.u32 %s44, 1
        %s183 = smul.addr %s182, 16
        %s184 = scalar_lea.vmem [#allocation3], %s183
        // Predicated region
        $region29: #{tpu_custom_call.1} parent=27 // pred_check
          %p185 = pneg %p57
        $region30: #{tpu_custom_call.1} parent=27 // pred_check_branch
          %187 = sbr.rel (%p185) target = $region32
        $region31: #{tpu_custom_call.1} parent=27 // pred_region
          %189 = dma.done %s181, 256
        $region32: #{tpu_custom_call.1} parent=27 // pred_fallthru
          _
        %s190 = sand.u32 %s72, 1
        %s191 = scalar_lea.sflag [#allocation7], %s190
        %s192 = sand.u32 %s72, 1
        %s193 = smul.addr %s192, 8
        %s194 = scalar_lea.vmem [#allocation6], %s193
        // Predicated region
        $region33: #{tpu_custom_call.1} parent=27 // pred_check
          %p195 = pneg %p85
        $region34: #{tpu_custom_call.1} parent=27 // pred_check_branch
          %197 = sbr.rel (%p195) target = $region36
        $region35: #{tpu_custom_call.1} parent=27 // pred_region
          %199 = dma.done %s191, 128
        $region36: #{tpu_custom_call.1} parent=27 // pred_fallthru
          _
        %s200 = sand.u32 %s44, 1
        %s201 = scalar_lea.sflag [#allocation4], %s200
        %s202 = sand.u32 %s44, 1
        %s203 = smul.addr %s202, 16
        %s204 = scalar_lea.vmem [#allocation3], %s203
        %p205 = pneg %p57
        %p206 = pneg %p54
        %s207 = sand.u32 %s72, 1
        %s208 = scalar_lea.sflag [#allocation7], %s207
        %s209 = sand.u32 %s72, 1
        %s210 = smul.addr %s209, 8
        %s211 = scalar_lea.vmem [#allocation6], %s210
        %p212 = pneg %p85
        %p213 = pneg %p82
        %p214 = pneg %p111
        %p215 = pneg %p108
        %s216 = sand.u32 %s98, 1
        %s217 = scalar_lea.sflag [#allocation5], %s216
        %s218 = sand.u32 %s98, 1
        %s219 = smul.addr %s218, 8
        %s220 = scalar_lea.vmem [#allocation8], %s219
        %p221 = scmp.eq.s32.totalorder %s27, 0
        // Predicated region
        $region37: #{tpu_custom_call.1} parent=27 // pred_check
          %p222 = pneg %p221
        $region38: #{tpu_custom_call.1} parent=27 // pred_check_branch
          %224 = sbr.rel (%p222) target = $region40
        $region39: #{tpu_custom_call.1} parent=27 // pred_region
          %225 = vst [vmem:[#allocation2] sm:$0xff] 0.0
        $region40: #{tpu_custom_call.1} parent=27 // pred_fallthru
          _
        %v226 = vld [vmem:[%s194] sm:$0xff]
        %v227 = vlaneseq
        %v228 = vshrl.u32 %v227, 7
        %s229 = smul.u32 %s27, 8
        %v230 = vstv %s229
        %v231 = vadd.s32 %v228, %v230
        %v232 = vlaneseq
        %v233 = vand.u32 %v232, 127
        %v234 = vmul.u32 %v231, 128
        %v235 = vadd.s32 %v234, %v233
        %vm236 = vcmp.lt.s32.totalorder %v235, 256
        %v237 = vld [vmem:[%s184] sm:$0xff]
        %s238 = scalar_lea.vmem %s184, 8 [#allocation3]
        %v239 = vld [vmem:[%s238] sm:$0xff]
        %v240 = vmul.u32 %v226, 2
        %v241 = vsub.s32 %v240, 1
        %v242 = vcvt.s32.f32 %v241
        %v243 = vsub.f32 %v239, %v237
        %v244 = vmul.f32 %v242, %v243
        %v245 = vsub.f32 0.0, %v244
        %v246 = vmul.f32 %v245, 1.442695
        %v247 = vpow.pop %v246
        %v248 = vadd.f32 %v247, 1.0
        %v249 = vrcp.pop %v248
        %v250 = vmul.f32 %v248, %v249
        %v251 = vsub.f32 1.0, %v250
        %v252 = vmul.f32 %v249, %v251
        %v253 = vadd.f32 %v249, %v252
        %vm254 = vweird.f32 %v248
        %vm255 = vweird.f32 %v249
        %vm256 = vmor %vm254, %vm255
        %v257 = vsel %vm256, %v249, %v253
        %v258 = vand.u32 2147483647, %v248
        %vm259 = vcmp.eq.f32.partialorder %v258, 8.507059e+37
        %v260 = vand.u32 %v248, 2147483648
        %v261 = vor.u32 1.1754944e-38, %v260
        %v262 = vsel %vm259, %v261, %v257
        %v263 = vmul.f32 1.0, %v262
        %v264 = vsel %vm236, %v263, 0.0
        %v265 = vld [vmem:[#allocation2] sm:$0xff]
        %v266 = vadd.f32 %v264, 0.0
        %v267 = vadd.f32 %v265, %v266
        %268 = vst [vmem:[#allocation2] sm:$0xff] %v267
        // Predicated region
        $region41: #{tpu_custom_call.1} parent=27 // pred_check
          %p269 = pneg %p221
        $region42: #{tpu_custom_call.1} parent=27 // pred_check_branch
          %271 = sbr.rel (%p269) target = $region44
        $region43: #{tpu_custom_call.1} parent=27 // pred_region
          %v272 = vld [vmem:[#allocation2] sm:$0xff]
          %273 = vadd.xlane.f32.xlu0 %v272
          %v274 = vpop.xlane.xlu0 %273
          %v275 = vrot.slane %v274, 4
          %v276 = vadd.f32 %v274, %v275
          %v277 = vrot.slane %v276, 2
          %v278 = vadd.f32 %v276, %v277
          %v279 = vrot.slane %v278, 1
          %v280 = vadd.f32 %v278, %v279
          %s281 = vtos %v280
          %v282 = vstv %s281
          %v283 = vmul.f32 %v282, 2.0
          %v284 = vadd.f32 %v283, 1.0
          %v285 = vrcp.pop 513.0
          %v286 = vmul.f32 513.0, %v285
          %v287 = vsub.f32 1.0, %v286
          %v288 = vmul.f32 %v285, %v287
          %v289 = vadd.f32 %v285, %v288
          %vm290 = vweird.f32 %v285
          %v291 = vsel %vm290, %v285, %v289
          %v292 = vmul.f32 %v284, %v291
          %v293 = vsub.f32 1.0, %v292
          %294 = vst [vmem:[%s220] sm:$0xff] %v293
        $region44: #{tpu_custom_call.1} parent=27 // pred_fallthru
          _
        %s295 = sand.u32 %s98, 1
        %s296 = scalar_lea.sflag [#allocation5], %s295
        %s297 = sand.u32 %s98, 1
        %s298 = smul.addr %s297, 8
        %s299 = scalar_lea.vmem [#allocation8], %s298
        // Predicated region
        $region45: #{tpu_custom_call.1} parent=27 // pred_check
          %p300 = pneg %p108
        $region46: #{tpu_custom_call.1} parent=27 // pred_check_branch
          %302 = sbr.rel (%p300) target = $region48
        $region47: #{tpu_custom_call.1} parent=27 // pred_region
          %304 = vsyncadd %s296, 0
          %s305 = smul.addr %s26, 8
          %s306 = scalar_lea.hbm %s2, %s305
          %s308 = sshll.u32 %s299, 4
          %s309 = int_to_ptr.vmem [resolvable:$true] %s308
          %s310 = sshll.u32 %s306, 4
          %s311 = int_to_ptr.hbm [resolvable:$true] %s310
          %313 = dma.vmem_to_hbm [thread:$0]  %s309, 128, %s311, %s296
        $region48: #{tpu_custom_call.1} parent=27 // pred_fallthru
          _
      $region28: #{tpu_custom_call.1} parent=5 // pred_fallthru
        _
      %p314 = scmp.le.s32.totalorder 2, %s17
      // Predicated region
      $region49: #{tpu_custom_call.1} parent=5 // pred_check
        %p315 = pneg %p314
      $region50: #{tpu_custom_call.1} parent=5 // pred_check_branch
        %317 = sbr.rel (%p315) target = $region52
      $region51: #{tpu_custom_call.1} parent=5 // pred_region
        %s318 = ssub.s32 %s17, 2
        // Predicated region
        $region53: #{tpu_custom_call.1} parent=51 // pred_check
          %p319 = pneg %p114
        $region54: #{tpu_custom_call.1} parent=51 // pred_check_branch
          %321 = sbr.rel (%p319) target = $region56
        $region55: #{tpu_custom_call.1} parent=51 // pred_region
          %s322 = sand.u32 %s99, 1
          %s323 = scalar_lea.sflag [#allocation5], %s322
          %s324 = sand.u32 %s99, 1
          %s325 = smul.addr %s324, 8
          %s326 = scalar_lea.vmem [#allocation8], %s325
          %328 = dma.done %s323, 128
        $region56: #{tpu_custom_call.1} parent=51 // pred_fallthru
          _
      $region52: #{tpu_custom_call.1} parent=5 // pred_fallthru
        _
    $region6: #{tpu_custom_call.1} parent=1 // loop_footer
      %s21 = sadd.s32 1, %s17
    $region7: #{tpu_custom_call.1} parent=1 // loop_footer_branch
      %16 = sbr.rel target = $region3
    $region8: #{tpu_custom_call.1} parent=1 // loop_exit
      _
    %329 = vsyncpa [#allocation4], 1
    %s330 = scalar_lea.sflag [#allocation4], 1
    %331 = vsyncpa %s330, 1
    %332 = vsyncpa [#allocation7], 1
    %s333 = scalar_lea.sflag [#allocation7], 1
    %334 = vsyncpa %s333, 1
    %335 = vsyncpa [#allocation5], 1
    %s336 = scalar_lea.sflag [#allocation5], 1
    %337 = vsyncpa %s336, 1

</llo_original>
